<compile_context>
chip_gen: v6e
topology: v6e:2x2x1
jax: 0.10.0
libtpu: 0.0.40
codegen_flags: <defaults>
</compile_context>

<pallas_src>
import functools

import jax
import jax.numpy as jnp
from jax.experimental import pallas as pl
from jax.experimental.pallas import tpu as pltpu

# Synthetic hyper-parameters (mirrors MLP_PARAMS in the reference module).
MLP_PARAMS = {
    "hidden_dims": [32, 32],
    "dropout": 0.1,   # inference-mode forward => dropout is identity
}


def _round_up(x, m):
    return (x + m - 1) // m * m


def _mlp_kernel(x_ref, w1_ref, b1_ref, w2_ref, b2_ref, w3t_ref, b3_ref, o_ref):
    """Fused MLP tile: (Linear+ReLU) -> (Linear+ReLU) -> Linear.

    Dropout layers are identity at inference time, so they are elided.
    Hidden-layer matmuls run on the MXU with f32 accumulation; the (H1 -> 1)
    output layer is a VPU multiply + XLU lane reduction, written lane-dense.
    """
    mxu_dtype = w1_ref.dtype                       # f32, or bf16 on v6e/v7x
    x = x_ref[...].astype(mxu_dtype)

    h = jnp.dot(x, w1_ref[...], preferred_element_type=jnp.float32) + b1_ref[...]
    h = jnp.maximum(h, 0.0)                        # f32 element-wise (v5e friendly)
    # TODO(synk): training-mode dropout (Bernoulli masking via pltpu.prng_*) not
    # implemented; forward here matches eval()/inference semantics.

    h = jnp.dot(h.astype(mxu_dtype), w2_ref[...],
                preferred_element_type=jnp.float32) + b2_ref[...]
    h = jnp.maximum(h, 0.0)

    # Final layer: a (H1, 1) RHS would waste all but one MXU column, so do it
    # on the VPU: multiply by the (1, H1) weight row and reduce over lanes.
    out = jnp.sum(h * w3t_ref[...], axis=-1)       # (block_b,)
    o_ref[...] = out.reshape(o_ref.shape) + b3_ref[...]   # (1, block_b) lane-dense


@functools.partial(jax.jit, static_argnames=("block_b", "use_bf16_mxu"))
def mlp_forward(x, params, *, block_b=1024, use_bf16_mxu=False):
    """Pallas-fused MLP forward. x: [B, D] float32 -> [B] float32."""
    w1, b1, w2, b2, w3, b3 = params
    B, D = x.shape
    H0 = w1.shape[1]
    H1 = w2.shape[1]

    if use_bf16_mxu:
        # Cast hidden-layer weights once (wrapper-side, not per grid step);
        # activations are cast per tile inside the kernel.  Recommended on
        # v6e/v7x (native bf16 MXU); accumulation stays f32.
        w1 = w1.astype(jnp.bfloat16)
        w2 = w2.astype(jnp.bfloat16)

    # Pre-transpose the (H1, 1) output weights to a lane-major (1, H1) row so
    # the kernel needs no per-step column->row relayout.
    w3_t = w3.reshape(1, H1)

    # Batch tile: large and lane-aligned (multiple of 128), padded batch,
    # cdiv grid.  Per-step VMEM footprint is tiny (block_b*D*4 bytes for x),
    # so large tiles are essentially free and amortize per-step overhead.
    bb = max(128, min(block_b, _round_up(B, 128)))
    bb = _round_up(bb, 128)
    nb = pl.cdiv(B, bb)
    B_pad = nb * bb
    if B_pad != B:
        x = jnp.pad(x, ((0, B_pad - B), (0, 0)))
    # NOTE: feature dims (16/32) are far below the 128-lane vreg width, so MXU
    # lane utilization is intrinsically low for a single head; packing several
    # independent MLP heads side-by-side in the lane dim is the only way to
    # fill the MXU — out of scope for a single-module port.

    out = pl.pallas_call(
        _mlp_kernel,
        out_shape=jax.ShapeDtypeStruct((1, B_pad), jnp.float32),
        grid_spec=pl.GridSpec(
            grid=(nb,),
            in_specs=[
                # x: tiled over batch (sublanes)
                pl.BlockSpec((bb, D), lambda i: (i, 0)),
                # weights/biases: full arrays, resident across all grid steps
                pl.BlockSpec((D, H0), lambda i: (0, 0)),
                pl.BlockSpec((1, H0), lambda i: (0, 0)),
                pl.BlockSpec((H0, H1), lambda i: (0, 0)),
                pl.BlockSpec((1, H1), lambda i: (0, 0)),
                pl.BlockSpec((1, H1), lambda i: (0, 0)),   # w3 transposed
                pl.BlockSpec((1, 1), lambda i: (0, 0)),
            ],
            # lane-dense output: batch along the lane (last) dimension
            out_specs=pl.BlockSpec((1, bb), lambda i: (0, i)),
        ),
        compiler_params=pltpu.CompilerParams(
            # parallel batch axis -> multi-step grids shard across v7x's 2 TCs
            dimension_semantics=("parallel",),
        ),
    )(x, w1, b1, w2, b2, w3_t, b3)

    # .squeeze() of the torch module + drop batch padding (glue, not hot path)
    return out[0, :B]


def init_params(key, input_dim, hidden_dims):
    """Deterministic PyTorch-style init: U(-1/sqrt(fan_in), 1/sqrt(fan_in)).

    Weights are stored transposed relative to torch ([in, out]) so the kernel
    can do x @ W directly.
    """
    dims = [input_dim] + list(hidden_dims) + [1]
    params = []
    for fan_in, fan_out in zip(dims[:-1], dims[1:]):
        key, kw, kb = jax.random.split(key, 3)
        bound = 1.0 / jnp.sqrt(fan_in)
        w = jax.random.uniform(
            kw, (fan_in, fan_out), jnp.float32, minval=-bound, maxval=bound
        )
        b = jax.random.uniform(
            kb, (1, fan_out), jnp.float32, minval=-bound, maxval=bound
        )
        params.extend([w, b])
    return tuple(params)


def mlp_reference(x, params):
    """Pure-JAX reference for correctness checking."""
    w1, b1, w2, b2, w3, b3 = params
    h = jnp.maximum(x @ w1 + b1, 0.0)
    h = jnp.maximum(h @ w2 + b2, 0.0)
    return (h @ w3 + b3)[:, 0]


if __name__ == "__main__":
    key = jax.random.PRNGKey(0)
    key, kx, kp = jax.random.split(key, 3)

    batch, input_dim = 16, 16
    x = jax.random.normal(kx, (batch, input_dim), dtype=jnp.float32)
    params = init_params(kp, input_dim, MLP_PARAMS["hidden_dims"])
    ref = mlp_reference(x, params)

    # f32 path (all generations): exact-match vs reference.
    out = jax.block_until_ready(mlp_forward(x, params))
    assert out.shape == (batch,), out.shape
    assert jnp.allclose(out, ref, atol=1e-5, rtol=1e-5), (out, ref)

    # bf16-MXU path (recommended on v6e/v7x): f32 accumulation, loose tol.
    out_bf16 = jax.block_until_ready(mlp_forward(x, params, use_bf16_mxu=True))
    assert jnp.allclose(out_bf16, ref, atol=5e-2, rtol=5e-2), (out_bf16, ref)

    # Non-divisible batch + multi-step grid (exercises padding/tail handling).
    key, kx2 = jax.random.split(key)
    x2 = jax.random.normal(kx2, (300, input_dim), dtype=jnp.float32)
    out2 = jax.block_until_ready(mlp_forward(x2, params, block_b=128))
    ref2 = mlp_reference(x2, params)
    assert out2.shape == (300,), out2.shape
    assert jnp.allclose(out2, ref2, atol=1e-5, rtol=1e-5)

    print("KERNEL_OK")
</pallas_src>

<mosaic_0001>
module attributes {stable_mosaic.version = 11 : i64} {
  func.func @_mlp_kernel(%arg0: i32, %arg1: memref<128x16xf32, #tpu.memory_space<vmem>>, %arg2: memref<16x32xf32, #tpu.memory_space<vmem>>, %arg3: memref<1x32xf32, #tpu.memory_space<vmem>>, %arg4: memref<32x32xf32, #tpu.memory_space<vmem>>, %arg5: memref<1x32xf32, #tpu.memory_space<vmem>>, %arg6: memref<1x32xf32, #tpu.memory_space<vmem>>, %arg7: memref<1x1xf32, #tpu.memory_space<vmem>>, %arg8: memref<1x128xf32, #tpu.memory_space<vmem>>) attributes {dimension_semantics = [#tpu.dimension_semantics<parallel>], iteration_bounds = array<i64: 1>, scalar_prefetch = 0 : i64, scratch_operands = 0 : i64, tpu.core_type = #tpu.core_type<tc>, window_params = [{transform_indices = @transform_0, window_bounds = array<i64: 128, 16>}, {pipeline_mode = #tpu.pipeline_mode<synchronous>, transform_indices = @transform_1, window_bounds = array<i64: 16, 32>}, {pipeline_mode = #tpu.pipeline_mode<synchronous>, transform_indices = @transform_2, window_bounds = array<i64: 1, 32>}, {pipeline_mode = #tpu.pipeline_mode<synchronous>, transform_indices = @transform_3, window_bounds = array<i64: 32, 32>}, {pipeline_mode = #tpu.pipeline_mode<synchronous>, transform_indices = @transform_4, window_bounds = array<i64: 1, 32>}, {pipeline_mode = #tpu.pipeline_mode<synchronous>, transform_indices = @transform_5, window_bounds = array<i64: 1, 32>}, {pipeline_mode = #tpu.pipeline_mode<synchronous>, transform_indices = @transform_6, window_bounds = array<i64: 1, 1>}, {transform_indices = @transform_7, window_bounds = array<i64: 1, 128>}]} {
    %c0 = arith.constant 0 : index
    %c0_0 = arith.constant 0 : index
    %0 = vector.load %arg1[%c0, %c0_0] : memref<128x16xf32, #tpu.memory_space<vmem>>, vector<128x16xf32>
    %c0_1 = arith.constant 0 : index
    %c0_2 = arith.constant 0 : index
    %1 = vector.load %arg2[%c0_1, %c0_2] : memref<16x32xf32, #tpu.memory_space<vmem>>, vector<16x32xf32>
    %cst = arith.constant dense<0.000000e+00> : vector<128x32xf32>
    %2 = tpu.matmul %0, %1, %cst {dimension_numbers = #tpu.dot_dimension_numbers<[1], [0], [0], [1], [0, 0, 1, 1], [], []>} : vector<128x16xf32>, vector<16x32xf32>, vector<128x32xf32> -> vector<128x32xf32>
    %c0_3 = arith.constant 0 : index
    %c0_4 = arith.constant 0 : index
    %3 = vector.load %arg3[%c0_3, %c0_4] : memref<1x32xf32, #tpu.memory_space<vmem>>, vector<1x32xf32>
    %4 = vector.broadcast %3 : vector<1x32xf32> to vector<128x32xf32>
    %5 = arith.addf %2, %4 : vector<128x32xf32>
    %cst_5 = arith.constant 0.000000e+00 : f32
    %6 = vector.broadcast %cst_5 : f32 to vector<128x32xf32>
    %7 = arith.maximumf %5, %6 : vector<128x32xf32>
    %c0_6 = arith.constant 0 : index
    %c0_7 = arith.constant 0 : index
    %8 = vector.load %arg4[%c0_6, %c0_7] : memref<32x32xf32, #tpu.memory_space<vmem>>, vector<32x32xf32>
    %cst_8 = arith.constant dense<0.000000e+00> : vector<128x32xf32>
    %9 = tpu.matmul %7, %8, %cst_8 {dimension_numbers = #tpu.dot_dimension_numbers<[1], [0], [0], [1], [0, 0, 1, 1], [], []>} : vector<128x32xf32>, vector<32x32xf32>, vector<128x32xf32> -> vector<128x32xf32>
    %c0_9 = arith.constant 0 : index
    %c0_10 = arith.constant 0 : index
    %10 = vector.load %arg5[%c0_9, %c0_10] : memref<1x32xf32, #tpu.memory_space<vmem>>, vector<1x32xf32>
    %11 = vector.broadcast %10 : vector<1x32xf32> to vector<128x32xf32>
    %12 = arith.addf %9, %11 : vector<128x32xf32>
    %cst_11 = arith.constant 0.000000e+00 : f32
    %13 = vector.broadcast %cst_11 : f32 to vector<128x32xf32>
    %14 = arith.maximumf %12, %13 : vector<128x32xf32>
    %c0_12 = arith.constant 0 : index
    %c0_13 = arith.constant 0 : index
    %15 = vector.load %arg6[%c0_12, %c0_13] : memref<1x32xf32, #tpu.memory_space<vmem>>, vector<1x32xf32>
    %16 = vector.broadcast %15 : vector<1x32xf32> to vector<128x32xf32>
    %17 = arith.mulf %14, %16 : vector<128x32xf32>
    %cst_14 = arith.constant dense<0.000000e+00> : vector<128xf32>
    %18 = vector.multi_reduction <add>, %17, %cst_14 [1] : vector<128x32xf32> to vector<128xf32>
    %19 = vector.shape_cast %18 : vector<128xf32> to vector<1x128xf32>
    %c0_15 = arith.constant 0 : index
    %c0_16 = arith.constant 0 : index
    %20 = vector.load %arg7[%c0_15, %c0_16] : memref<1x1xf32, #tpu.memory_space<vmem>>, vector<1x1xf32>
    %21 = vector.broadcast %20 : vector<1x1xf32> to vector<1x128xf32>
    %22 = arith.addf %19, %21 : vector<1x128xf32>
    %c0_17 = arith.constant 0 : index
    %c0_18 = arith.constant 0 : index
    %23 = vector.load %arg8[%c0_17, %c0_18] : memref<1x128xf32, #tpu.memory_space<vmem>>, vector<1x128xf32>
    tpu.vector_store %arg8[%c0_17, %c0_18], %22 {strides = array<i32>} : memref<1x128xf32, #tpu.memory_space<vmem>>, vector<1x128xf32>,
    return
  }
  func.func @transform_0(%arg0: i32) -> (i32, i32) {
    %c0_i32 = arith.constant 0 : i32
    %c0_i32_0 = arith.constant 0 : i32
    return %arg0, %c0_i32 : i32, i32
  }
  func.func @transform_1(%arg0: i32) -> (i32, i32) {
    %c0_i32 = arith.constant 0 : i32
    %c0_i32_0 = arith.constant 0 : i32
    %c0_i32_1 = arith.constant 0 : i32
    return %c0_i32, %c0_i32_0 : i32, i32
  }
  func.func @transform_2(%arg0: i32) -> (i32, i32) {
    %c0_i32 = arith.constant 0 : i32
    %c0_i32_0 = arith.constant 0 : i32
    %c0_i32_1 = arith.constant 0 : i32
    return %c0_i32, %c0_i32_0 : i32, i32
  }
  func.func @transform_3(%arg0: i32) -> (i32, i32) {
    %c0_i32 = arith.constant 0 : i32
    %c0_i32_0 = arith.constant 0 : i32
    %c0_i32_1 = arith.constant 0 : i32
    return %c0_i32, %c0_i32_0 : i32, i32
  }
  func.func @transform_4(%arg0: i32) -> (i32, i32) {
    %c0_i32 = arith.constant 0 : i32
    %c0_i32_0 = arith.constant 0 : i32
    %c0_i32_1 = arith.constant 0 : i32
    return %c0_i32, %c0_i32_0 : i32, i32
  }
  func.func @transform_5(%arg0: i32) -> (i32, i32) {
    %c0_i32 = arith.constant 0 : i32
    %c0_i32_0 = arith.constant 0 : i32
    %c0_i32_1 = arith.constant 0 : i32
    return %c0_i32, %c0_i32_0 : i32, i32
  }
  func.func @transform_6(%arg0: i32) -> (i32, i32) {
    %c0_i32 = arith.constant 0 : i32
    %c0_i32_0 = arith.constant 0 : i32
    %c0_i32_1 = arith.constant 0 : i32
    return %c0_i32, %c0_i32_0 : i32, i32
  }
  func.func @transform_7(%arg0: i32) -> (i32, i32) {
    %c0_i32 = arith.constant 0 : i32
    %c0_i32_0 = arith.constant 0 : i32
    return %c0_i32, %arg0 : i32, i32
  }
}

</mosaic_0001>

<llo_original>
// kernel: mlp_forward.1
$region0: #{mlp_forward.1}
  #allocation0 [shape = 'u32[]', space=smem, size = 0x4, offset = 0x4, fixed_abs, tag = 'smem constant byte address 0x4 - core index']
  #allocation1 [shape = 'u32[144,128]{1,0:T(1,128)}', space=vmem, size = 0x12000, scoped, tag = 'internal scratch']
  #allocation2 [shape = 'f32[1,1]{1,0:T(1,128)S(1)}', space=vmem, size = 0x200, scoped, tag = 'scoped memory for mlp_forward.1']
  %s0 = inlined_call_operand.vmem [shape: f32[128,16], index: 0, kind: input, shape index: {}]
  %s1 = inlined_call_operand.vmem [shape: f32[16,32], index: 1, kind: input, shape index: {}]
  %s2 = inlined_call_operand.vmem [shape: f32[1,32], index: 2, kind: input, shape index: {}]
  %s3 = inlined_call_operand.vmem [shape: f32[32,32], index: 3, kind: input, shape index: {}]
  %s4 = inlined_call_operand.vmem [shape: f32[1,32], index: 4, kind: input, shape index: {}]
  %s5 = inlined_call_operand.vmem [shape: f32[1,32], index: 5, kind: input, shape index: {}]
  %s6 = inlined_call_operand.<no memory space> [shape: f32[1,1], index: 6, kind: input, shape index: {}]
  %s7 = inlined_call_operand.vmem [shape: f32[1,128], index: 7, kind: output, shape index: {}]
  %s8 = sld [smem:[#allocation0]]
  $region38: #{mlp_forward.1} parent=0
    _
  %s10 = ssub.s32 1, %s8
  %s11 = scalar_select 0, %s10, %s8
  %v12 = vstv %s6
  %13 = vst [vmem:[#allocation2] sm:$0x1] %v12
  // Predicated region
  $region2: #{mlp_forward.1} parent=0 // pred_check
    _
  $region3: #{mlp_forward.1} parent=0 // pred_check_branch
    %15 = sbr.rel (0) target = $region5
  $region4: #{mlp_forward.1} parent=0 // pred_region
    _
  $region5: #{mlp_forward.1} parent=0 // pred_fallthru
    _
  // Predicated region
  $region6: #{mlp_forward.1} parent=0 // pred_check
    _
  $region7: #{mlp_forward.1} parent=0 // pred_check_branch
    %17 = sbr.rel (0) target = $region9
  $region8: #{mlp_forward.1} parent=0 // pred_region
    _
  $region9: #{mlp_forward.1} parent=0 // pred_fallthru
    _
  // Predicated region
  $region10: #{mlp_forward.1} parent=0 // pred_check
    _
  $region11: #{mlp_forward.1} parent=0 // pred_check_branch
    %19 = sbr.rel (0) target = $region13
  $region12: #{mlp_forward.1} parent=0 // pred_region
    _
  $region13: #{mlp_forward.1} parent=0 // pred_fallthru
    _
  // Predicated region
  $region14: #{mlp_forward.1} parent=0 // pred_check
    _
  $region15: #{mlp_forward.1} parent=0 // pred_check_branch
    %21 = sbr.rel (0) target = $region17
  $region16: #{mlp_forward.1} parent=0 // pred_region
    _
  $region17: #{mlp_forward.1} parent=0 // pred_fallthru
    _
  // Predicated region
  $region18: #{mlp_forward.1} parent=0 // pred_check
    _
  $region19: #{mlp_forward.1} parent=0 // pred_check_branch
    %23 = sbr.rel (0) target = $region21
  $region20: #{mlp_forward.1} parent=0 // pred_region
    _
  $region21: #{mlp_forward.1} parent=0 // pred_fallthru
    _
  // Predicated region
  $region22: #{mlp_forward.1} parent=0 // pred_check
    _
  $region23: #{mlp_forward.1} parent=0 // pred_check_branch
    %25 = sbr.rel (0) target = $region25
  $region24: #{mlp_forward.1} parent=0 // pred_region
    _
  $region25: #{mlp_forward.1} parent=0 // pred_fallthru
    _
  // Predicated region
  $region26: #{mlp_forward.1} parent=0 // pred_check
    _
  $region27: #{mlp_forward.1} parent=0 // pred_check_branch
    %27 = sbr.rel (0) target = $region29
  $region28: #{mlp_forward.1} parent=0 // pred_region
    _
  $region29: #{mlp_forward.1} parent=0 // pred_fallthru
    _
  %v28 = vld [vmem:[%s0] sm:$0xff]
  %v29 = vld [vmem:[%s0 + $0x8] sm:$0xff]
  %v30 = vld [vmem:[%s0 + $0x10] sm:$0xff]
  %v31 = vld [vmem:[%s0 + $0x18] sm:$0xff]
  %v32 = vld [vmem:[%s0 + $0x20] sm:$0xff]
  %v33 = vld [vmem:[%s0 + $0x28] sm:$0xff]
  %v34 = vld [vmem:[%s0 + $0x30] sm:$0xff]
  %v35 = vld [vmem:[%s0 + $0x38] sm:$0xff]
  %v36 = vld [vmem:[%s0 + $0x40] sm:$0xff]
  %v37 = vld [vmem:[%s0 + $0x48] sm:$0xff]
  %v38 = vld [vmem:[%s0 + $0x50] sm:$0xff]
  %v39 = vld [vmem:[%s0 + $0x58] sm:$0xff]
  %v40 = vld [vmem:[%s0 + $0x60] sm:$0xff]
  %v41 = vld [vmem:[%s0 + $0x68] sm:$0xff]
  %v42 = vld [vmem:[%s0 + $0x70] sm:$0xff]
  %v43 = vld [vmem:[%s0 + $0x78] sm:$0xff]
  %v44 = vld [vmem:[%s1] sm:$0xff]
  %v45 = vld [vmem:[%s1 + $0x8] sm:$0xff]
  %v46 = vld [vmem:[%s2] sm:$0x1]
  %v48 = vlaneseq
  %v49 = vshrl.u32 %v48, 7
  %v50 = vsub.s32 0, %v49
  %v51 = vrot.slane %v46, %v50
  %vm53 = vcmask 130048
  %v55 = vsel %vm53, %v28, 0
  %v58 = vsel %vm53, %v29, 0
  %v61 = vsel %vm53, %v30, 0
  %v64 = vsel %vm53, %v31, 0
  %v67 = vsel %vm53, %v32, 0
  %v70 = vsel %vm53, %v33, 0
  %v73 = vsel %vm53, %v34, 0
  %v76 = vsel %vm53, %v35, 0
  %v79 = vsel %vm53, %v36, 0
  %v82 = vsel %vm53, %v37, 0
  %v85 = vsel %vm53, %v38, 0
  %v88 = vsel %vm53, %v39, 0
  %v91 = vsel %vm53, %v40, 0
  %v94 = vsel %vm53, %v41, 0
  %v97 = vsel %vm53, %v42, 0
  %v100 = vsel %vm53, %v43, 0
  %102 = vmatprep.subr.mxu0 0.0
  %103 = vmatpush1.msra.mxu0 0.0
  %104 = vmatprep.subr.mxu0 0.0
  %105 = vmatpush1.msra.mxu0 0.0
  %106 = vmatprep.subr.mxu0 0.0
  %107 = vmatpush1.msra.mxu0 0.0
  %108 = vmatprep.subr.mxu0 0.0
  %109 = vmatpush1.msra.mxu0 0.0
  %110 = vmatprep.subr.mxu0 0.0
  %111 = vmatpush1.msra.mxu0 0.0
  %112 = vmatprep.subr.mxu0 0.0
  %113 = vmatpush1.msra.mxu0 0.0
  %114 = vmatprep.subr.mxu0 0.0
  %115 = vmatpush1.msra.mxu0 0.0
  %116 = vmatprep.subr.mxu0 0.0
  %117 = vmatpush1.msra.mxu0 0.0
  %118 = vmatprep.subr.mxu0 0.0
  %119 = vmatpush1.msra.mxu0 0.0
  %120 = vmatprep.subr.mxu0 0.0
  %121 = vmatpush1.msra.mxu0 0.0
  %122 = vmatprep.subr.mxu0 0.0
  %123 = vmatpush1.msra.mxu0 0.0
  %124 = vmatprep.subr.mxu0 0.0
  %125 = vmatpush1.msra.mxu0 0.0
  %126 = vmatprep.subr.mxu0 0.0
  %127 = vmatpush1.msra.mxu0 0.0
  %128 = vmatprep.subr.mxu0 0.0
  %129 = vmatpush1.msra.mxu0 0.0
  %130 = vmatprep.subr.mxu0 0.0
  %131 = vmatpush1.msra.mxu0 %v45
  %132 = vmatprep.subr.mxu0 0.0
  %133 = vmatpush1.msra.mxu0 %v44
  %134 = vmatprep.subr.mxu0 0.0
  %135 = vmatpush2.msra.mxu0 0.0
  %136 = vmatprep.subr.mxu0 0.0
  %137 = vmatpush2.msra.mxu0 0.0
  %138 = vmatprep.subr.mxu0 0.0
  %139 = vmatpush2.msra.mxu0 0.0
  %140 = vmatprep.subr.mxu0 0.0
  %141 = vmatpush2.msra.mxu0 0.0
  %142 = vmatprep.subr.mxu0 0.0
  %143 = vmatpush2.msra.mxu0 0.0
  %144 = vmatprep.subr.mxu0 0.0
  %145 = vmatpush2.msra.mxu0 0.0
  %146 = vmatprep.subr.mxu0 0.0
  %147 = vmatpush2.msra.mxu0 0.0
  %148 = vmatprep.subr.mxu0 0.0
  %149 = vmatpush2.msra.mxu0 0.0
  %150 = vmatprep.subr.mxu0 0.0
  %151 = vmatpush2.msra.mxu0 0.0
  %152 = vmatprep.subr.mxu0 0.0
  %153 = vmatpush2.msra.mxu0 0.0
  %154 = vmatprep.subr.mxu0 0.0
  %155 = vmatpush2.msra.mxu0 0.0
  %156 = vmatprep.subr.mxu0 0.0
  %157 = vmatpush2.msra.mxu0 0.0
  %158 = vmatprep.subr.mxu0 0.0
  %159 = vmatpush2.msra.mxu0 0.0
  %160 = vmatprep.subr.mxu0 0.0
  %161 = vmatpush2.msra.mxu0 0.0
  %162 = vmatprep.subr.mxu0 0.0
  %163 = vmatpush2.msra.mxu0 0.0
  %164 = vmatprep.subr.mxu0 0.0
  %165 = vmatpush2.msra.mxu0 0.0
  %166 = vmatprep.mubr.f32.mxu0 0.0
  %167 = vmatmul.mubr.f32.gmra.mxu0 %v55
  %v168 = vpop.f32.mrf.mxu0
  %v169 = vadd.f32 %v51, %v168
  %v170 = vpop.f32.mrf.mxu0
  %171 = vmatprep.mubr.f32.mxu0 0.0
  %172 = vmatmul.mubr.f32.gmra.mxu0 %v58
  %v173 = vpop.f32.mrf.mxu0
  %v174 = vadd.f32 %v51, %v173
  %v175 = vpop.f32.mrf.mxu0
  %176 = vmatprep.mubr.f32.mxu0 0.0
  %177 = vmatmul.mubr.f32.gmra.mxu0 %v61
  %v178 = vpop.f32.mrf.mxu0
  %v179 = vadd.f32 %v51, %v178
  %v180 = vpop.f32.mrf.mxu0
  %181 = vmatprep.mubr.f32.mxu0 0.0
  %182 = vmatmul.mubr.f32.gmra.mxu0 %v64
  %v183 = vpop.f32.mrf.mxu0
  %v184 = vadd.f32 %v51, %v183
  %v185 = vpop.f32.mrf.mxu0
  %186 = vmatprep.mubr.f32.mxu0 0.0
  %187 = vmatmul.mubr.f32.gmra.mxu0 %v67
  %v188 = vpop.f32.mrf.mxu0
  %v189 = vadd.f32 %v51, %v188
  %v190 = vpop.f32.mrf.mxu0
  %191 = vmatprep.mubr.f32.mxu0 0.0
  %192 = vmatmul.mubr.f32.gmra.mxu0 %v70
  %v193 = vpop.f32.mrf.mxu0
  %v194 = vadd.f32 %v51, %v193
  %v195 = vpop.f32.mrf.mxu0
  %196 = vmatprep.mubr.f32.mxu0 0.0
  %197 = vmatmul.mubr.f32.gmra.mxu0 %v73
  %v198 = vpop.f32.mrf.mxu0
  %v199 = vadd.f32 %v51, %v198
  %v200 = vpop.f32.mrf.mxu0
  %201 = vmatprep.mubr.f32.mxu0 0.0
  %202 = vmatmul.mubr.f32.gmra.mxu0 %v76
  %v203 = vpop.f32.mrf.mxu0
  %v204 = vadd.f32 %v51, %v203
  %v205 = vpop.f32.mrf.mxu0
  %206 = vmatprep.mubr.f32.mxu0 0.0
  %207 = vmatmul.mubr.f32.gmra.mxu0 %v79
  %v208 = vpop.f32.mrf.mxu0
  %v209 = vadd.f32 %v51, %v208
  %v210 = vpop.f32.mrf.mxu0
  %211 = vmatprep.mubr.f32.mxu0 0.0
  %212 = vmatmul.mubr.f32.gmra.mxu0 %v82
  %v213 = vpop.f32.mrf.mxu0
  %v214 = vadd.f32 %v51, %v213
  %v215 = vpop.f32.mrf.mxu0
  %216 = vmatprep.mubr.f32.mxu0 0.0
  %217 = vmatmul.mubr.f32.gmra.mxu0 %v85
  %v218 = vpop.f32.mrf.mxu0
  %v219 = vadd.f32 %v51, %v218
  %v220 = vpop.f32.mrf.mxu0
  %221 = vmatprep.mubr.f32.mxu0 0.0
  %222 = vmatmul.mubr.f32.gmra.mxu0 %v88
  %v223 = vpop.f32.mrf.mxu0
  %v224 = vadd.f32 %v51, %v223
  %v225 = vpop.f32.mrf.mxu0
  %226 = vmatprep.mubr.f32.mxu0 0.0
  %227 = vmatmul.mubr.f32.gmra.mxu0 %v91
  %v228 = vpop.f32.mrf.mxu0
  %v229 = vadd.f32 %v51, %v228
  %v230 = vpop.f32.mrf.mxu0
  %231 = vmatprep.mubr.f32.mxu0 0.0
  %232 = vmatmul.mubr.f32.gmra.mxu0 %v94
  %v233 = vpop.f32.mrf.mxu0
  %v234 = vadd.f32 %v51, %v233
  %v235 = vpop.f32.mrf.mxu0
  %236 = vmatprep.mubr.f32.mxu0 0.0
  %237 = vmatmul.mubr.f32.gmra.mxu0 %v97
  %v238 = vpop.f32.mrf.mxu0
  %v239 = vadd.f32 %v51, %v238
  %v240 = vpop.f32.mrf.mxu0
  %241 = vmatprep.mubr.f32.mxu0 0.0
  %242 = vmatmul.mubr.f32.gmra.mxu0 %v100
  %v243 = vpop.f32.mrf.mxu0
  %v244 = vadd.f32 %v51, %v243
  %v245 = vpop.f32.mrf.mxu0
  %246 = vdwg.mxu0
  %v247 = vmax.f32 %v169, 0.0
  %v248 = vmax.f32 %v174, 0.0
  %v249 = vmax.f32 %v179, 0.0
  %v250 = vmax.f32 %v184, 0.0
  %v251 = vmax.f32 %v189, 0.0
  %v252 = vmax.f32 %v194, 0.0
  %v253 = vmax.f32 %v199, 0.0
  %v254 = vmax.f32 %v204, 0.0
  %v255 = vmax.f32 %v209, 0.0
  %v256 = vmax.f32 %v214, 0.0
  %v257 = vmax.f32 %v219, 0.0
  %v258 = vmax.f32 %v224, 0.0
  %v259 = vmax.f32 %v229, 0.0
  %v260 = vmax.f32 %v234, 0.0
  %v261 = vmax.f32 %v239, 0.0
  %v262 = vmax.f32 %v244, 0.0
  %v263 = vld [vmem:[%s3] sm:$0xff]
  %v264 = vld [vmem:[%s3 + $0x8] sm:$0xff]
  %v265 = vld [vmem:[%s3 + $0x10] sm:$0xff]
  %v266 = vld [vmem:[%s3 + $0x18] sm:$0xff]
  %v267 = vld [vmem:[%s4] sm:$0x1]
  %v269 = vlaneseq
  %v270 = vshrl.u32 %v269, 7
  %v271 = vsub.s32 0, %v270
  %v272 = vrot.slane %v267, %v271
  %vm274 = vcmask 261120
  %v276 = vsel %vm274, %v247, 0
  %v279 = vsel %vm274, %v248, 0
  %v282 = vsel %vm274, %v249, 0
  %v285 = vsel %vm274, %v250, 0
  %v288 = vsel %vm274, %v251, 0
  %v291 = vsel %vm274, %v252, 0
  %v294 = vsel %vm274, %v253, 0
  %v297 = vsel %vm274, %v254, 0
  %v300 = vsel %vm274, %v255, 0
  %v303 = vsel %vm274, %v256, 0
  %v306 = vsel %vm274, %v257, 0
  %v309 = vsel %vm274, %v258, 0
  %v312 = vsel %vm274, %v259, 0
  %v315 = vsel %vm274, %v260, 0
  %v318 = vsel %vm274, %v261, 0
  %v321 = vsel %vm274, %v262, 0
  %323 = vmatprep.subr.mxu0 0.0
  %324 = vmatpush1.msra.mxu0 0.0
  %325 = vmatprep.subr.mxu0 0.0
  %326 = vmatpush1.msra.mxu0 0.0
  %327 = vmatprep.subr.mxu0 0.0
  %328 = vmatpush1.msra.mxu0 0.0
  %329 = vmatprep.subr.mxu0 0.0
  %330 = vmatpush1.msra.mxu0 0.0
  %331 = vmatprep.subr.mxu0 0.0
  %332 = vmatpush1.msra.mxu0 0.0
  %333 = vmatprep.subr.mxu0 0.0
  %334 = vmatpush1.msra.mxu0 0.0
  %335 = vmatprep.subr.mxu0 0.0
  %336 = vmatpush1.msra.mxu0 0.0
  %337 = vmatprep.subr.mxu0 0.0
  %338 = vmatpush1.msra.mxu0 0.0
  %339 = vmatprep.subr.mxu0 0.0
  %340 = vmatpush1.msra.mxu0 0.0
  %341 = vmatprep.subr.mxu0 0.0
  %342 = vmatpush1.msra.mxu0 0.0
  %343 = vmatprep.subr.mxu0 0.0
  %344 = vmatpush1.msra.mxu0 0.0
  %345 = vmatprep.subr.mxu0 0.0
  %346 = vmatpush1.msra.mxu0 0.0
  %347 = vmatprep.subr.mxu0 0.0
  %348 = vmatpush1.msra.mxu0 %v266
  %349 = vmatprep.subr.mxu0 0.0
  %350 = vmatpush1.msra.mxu0 %v265
  %351 = vmatprep.subr.mxu0 0.0
  %352 = vmatpush1.msra.mxu0 %v264
  %353 = vmatprep.subr.mxu0 0.0
  %354 = vmatpush1.msra.mxu0 %v263
  %355 = vmatprep.subr.mxu0 0.0
  %356 = vmatpush2.msra.mxu0 0.0
  %357 = vmatprep.subr.mxu0 0.0
  %358 = vmatpush2.msra.mxu0 0.0
  %359 = vmatprep.subr.mxu0 0.0
  %360 = vmatpush2.msra.mxu0 0.0
  %361 = vmatprep.subr.mxu0 0.0
  %362 = vmatpush2.msra.mxu0 0.0
  %363 = vmatprep.subr.mxu0 0.0
  %364 = vmatpush2.msra.mxu0 0.0
  %365 = vmatprep.subr.mxu0 0.0
  %366 = vmatpush2.msra.mxu0 0.0
  %367 = vmatprep.subr.mxu0 0.0
  %368 = vmatpush2.msra.mxu0 0.0
  %369 = vmatprep.subr.mxu0 0.0
  %370 = vmatpush2.msra.mxu0 0.0
  %371 = vmatprep.subr.mxu0 0.0
  %372 = vmatpush2.msra.mxu0 0.0
  %373 = vmatprep.subr.mxu0 0.0
  %374 = vmatpush2.msra.mxu0 0.0
  %375 = vmatprep.subr.mxu0 0.0
  %376 = vmatpush2.msra.mxu0 0.0
  %377 = vmatprep.subr.mxu0 0.0
  %378 = vmatpush2.msra.mxu0 0.0
  %379 = vmatprep.subr.mxu0 0.0
  %380 = vmatpush2.msra.mxu0 0.0
  %381 = vmatprep.subr.mxu0 0.0
  %382 = vmatpush2.msra.mxu0 0.0
  %383 = vmatprep.subr.mxu0 0.0
  %384 = vmatpush2.msra.mxu0 0.0
  %385 = vmatprep.subr.mxu0 0.0
  %386 = vmatpush2.msra.mxu0 0.0
  %387 = vmatprep.mubr.f32.mxu0 0.0
  %388 = vmatmul.mubr.f32.gmra.mxu0 %v276
  %v389 = vpop.f32.mrf.mxu0
  %v390 = vadd.f32 %v272, %v389
  %v391 = vpop.f32.mrf.mxu0
  %392 = vmatprep.mubr.f32.mxu0 0.0
  %393 = vmatmul.mubr.f32.gmra.mxu0 %v279
  %v394 = vpop.f32.mrf.mxu0
  %v395 = vadd.f32 %v272, %v394
  %v396 = vpop.f32.mrf.mxu0
  %397 = vmatprep.mubr.f32.mxu0 0.0
  %398 = vmatmul.mubr.f32.gmra.mxu0 %v282
  %v399 = vpop.f32.mrf.mxu0
  %v400 = vadd.f32 %v272, %v399
  %v401 = vpop.f32.mrf.mxu0
  %402 = vmatprep.mubr.f32.mxu0 0.0
  %403 = vmatmul.mubr.f32.gmra.mxu0 %v285
  %v404 = vpop.f32.mrf.mxu0
  %v405 = vadd.f32 %v272, %v404
  %v406 = vpop.f32.mrf.mxu0
  %407 = vmatprep.mubr.f32.mxu0 0.0
  %408 = vmatmul.mubr.f32.gmra.mxu0 %v288
  %v409 = vpop.f32.mrf.mxu0
  %v410 = vadd.f32 %v272, %v409
  %v411 = vpop.f32.mrf.mxu0
  %412 = vmatprep.mubr.f32.mxu0 0.0
  %413 = vmatmul.mubr.f32.gmra.mxu0 %v291
  %v414 = vpop.f32.mrf.mxu0
  %v415 = vadd.f32 %v272, %v414
  %v416 = vpop.f32.mrf.mxu0
  %417 = vmatprep.mubr.f32.mxu0 0.0
  %418 = vmatmul.mubr.f32.gmra.mxu0 %v294
  %v419 = vpop.f32.mrf.mxu0
  %v420 = vadd.f32 %v272, %v419
  %v421 = vpop.f32.mrf.mxu0
  %422 = vmatprep.mubr.f32.mxu0 0.0
  %423 = vmatmul.mubr.f32.gmra.mxu0 %v297
  %v424 = vpop.f32.mrf.mxu0
  %v425 = vadd.f32 %v272, %v424
  %v426 = vpop.f32.mrf.mxu0
  %427 = vmatprep.mubr.f32.mxu0 0.0
  %428 = vmatmul.mubr.f32.gmra.mxu0 %v300
  %v429 = vpop.f32.mrf.mxu0
  %v430 = vadd.f32 %v272, %v429
  %v431 = vpop.f32.mrf.mxu0
  %432 = vmatprep.mubr.f32.mxu0 0.0
  %433 = vmatmul.mubr.f32.gmra.mxu0 %v303
  %v434 = vpop.f32.mrf.mxu0
  %v435 = vadd.f32 %v272, %v434
  %v436 = vpop.f32.mrf.mxu0
  %437 = vmatprep.mubr.f32.mxu0 0.0
  %438 = vmatmul.mubr.f32.gmra.mxu0 %v306
  %v439 = vpop.f32.mrf.mxu0
  %v440 = vadd.f32 %v272, %v439
  %v441 = vpop.f32.mrf.mxu0
  %442 = vmatprep.mubr.f32.mxu0 0.0
  %443 = vmatmul.mubr.f32.gmra.mxu0 %v309
  %v444 = vpop.f32.mrf.mxu0
  %v445 = vadd.f32 %v272, %v444
  %v446 = vpop.f32.mrf.mxu0
  %447 = vmatprep.mubr.f32.mxu0 0.0
  %448 = vmatmul.mubr.f32.gmra.mxu0 %v312
  %v449 = vpop.f32.mrf.mxu0
  %v450 = vadd.f32 %v272, %v449
  %v451 = vpop.f32.mrf.mxu0
  %452 = vmatprep.mubr.f32.mxu0 0.0
  %453 = vmatmul.mubr.f32.gmra.mxu0 %v315
  %v454 = vpop.f32.mrf.mxu0
  %v455 = vadd.f32 %v272, %v454
  %v456 = vpop.f32.mrf.mxu0
  %457 = vmatprep.mubr.f32.mxu0 0.0
  %458 = vmatmul.mubr.f32.gmra.mxu0 %v318
  %v459 = vpop.f32.mrf.mxu0
  %v460 = vadd.f32 %v272, %v459
  %v461 = vpop.f32.mrf.mxu0
  %462 = vmatprep.mubr.f32.mxu0 0.0
  %463 = vmatmul.mubr.f32.gmra.mxu0 %v321
  %v464 = vpop.f32.mrf.mxu0
  %v465 = vadd.f32 %v272, %v464
  %v466 = vpop.f32.mrf.mxu0
  %467 = vdwg.mxu0
  %v468 = vmax.f32 %v390, 0.0
  %v469 = vmax.f32 %v395, 0.0
  %v470 = vmax.f32 %v400, 0.0
  %v471 = vmax.f32 %v405, 0.0
  %v472 = vmax.f32 %v410, 0.0
  %v473 = vmax.f32 %v415, 0.0
  %v474 = vmax.f32 %v420, 0.0
  %v475 = vmax.f32 %v425, 0.0
  %v476 = vmax.f32 %v430, 0.0
  %v477 = vmax.f32 %v435, 0.0
  %v478 = vmax.f32 %v440, 0.0
  %v479 = vmax.f32 %v445, 0.0
  %v480 = vmax.f32 %v450, 0.0
  %v481 = vmax.f32 %v455, 0.0
  %v482 = vmax.f32 %v460, 0.0
  %v483 = vmax.f32 %v465, 0.0
  %v484 = vld [vmem:[%s5] sm:$0x1]
  %v486 = vlaneseq
  %v487 = vshrl.u32 %v486, 7
  %v488 = vsub.s32 0, %v487
  %v489 = vrot.slane %v484, %v488
  %v491 = vmul.f32 %v468, %v489
  %v492 = vmul.f32 %v469, %v489
  %v493 = vmul.f32 %v470, %v489
  %v494 = vmul.f32 %v471, %v489
  %v495 = vmul.f32 %v472, %v489
  %v496 = vmul.f32 %v473, %v489
  %v497 = vmul.f32 %v474, %v489
  %v498 = vmul.f32 %v475, %v489
  %v499 = vmul.f32 %v476, %v489
  %v500 = vmul.f32 %v477, %v489
  %v501 = vmul.f32 %v478, %v489
  %v502 = vmul.f32 %v479, %v489
  %v503 = vmul.f32 %v480, %v489
  %v504 = vmul.f32 %v481, %v489
  %v505 = vmul.f32 %v482, %v489
  %v506 = vmul.f32 %v483, %v489
  %v507 = vsel %vm274, %v491, 0.0
  %508 = vadd.xlane.f32.xlu0 %v507
  %v509 = vpop.xlane.xlu0 %508
  %v510 = vsel %vm274, %v492, 0.0
  %511 = vadd.xlane.f32.xlu0 %v510
  %v512 = vpop.xlane.xlu0 %511
  %v513 = vsel %vm274, %v493, 0.0
  %514 = vadd.xlane.f32.xlu0 %v513
  %v515 = vpop.xlane.xlu0 %514
  %v516 = vsel %vm274, %v494, 0.0
  %517 = vadd.xlane.f32.xlu0 %v516
  %v518 = vpop.xlane.xlu0 %517
  %v519 = vsel %vm274, %v495, 0.0
  %520 = vadd.xlane.f32.xlu0 %v519
  %v521 = vpop.xlane.xlu0 %520
  %v522 = vsel %vm274, %v496, 0.0
  %523 = vadd.xlane.f32.xlu0 %v522
  %v524 = vpop.xlane.xlu0 %523
  %v525 = vsel %vm274, %v497, 0.0
  %526 = vadd.xlane.f32.xlu0 %v525
  %v527 = vpop.xlane.xlu0 %526
  %v528 = vsel %vm274, %v498, 0.0
  %529 = vadd.xlane.f32.xlu0 %v528
  %v530 = vpop.xlane.xlu0 %529
  %v531 = vsel %vm274, %v499, 0.0
  %532 = vadd.xlane.f32.xlu0 %v531
  %v533 = vpop.xlane.xlu0 %532
  %v534 = vsel %vm274, %v500, 0.0
  %535 = vadd.xlane.f32.xlu0 %v534
  %v536 = vpop.xlane.xlu0 %535
  %v537 = vsel %vm274, %v501, 0.0
  %538 = vadd.xlane.f32.xlu0 %v537
  %v539 = vpop.xlane.xlu0 %538
  %v540 = vsel %vm274, %v502, 0.0
  %541 = vadd.xlane.f32.xlu0 %v540
  %v542 = vpop.xlane.xlu0 %541
  %v543 = vsel %vm274, %v503, 0.0
  %544 = vadd.xlane.f32.xlu0 %v543
  %v545 = vpop.xlane.xlu0 %544
  %v546 = vsel %vm274, %v504, 0.0
  %547 = vadd.xlane.f32.xlu0 %v546
  %v548 = vpop.xlane.xlu0 %547
  %v549 = vsel %vm274, %v505, 0.0
  %550 = vadd.xlane.f32.xlu0 %v549
  %v551 = vpop.xlane.xlu0 %550
  %v552 = vsel %vm274, %v506, 0.0
  %553 = vadd.xlane.f32.xlu0 %v552
  %v554 = vpop.xlane.xlu0 %553
  %v555 = vld [vmem:[#allocation2] sm:$0x1]
  %557 = vset.pattern.permute.xlu0 0
  %558 = vperm.xlu0 %557, %v555
  %v559 = vpop.permute.xlu0 %558
  %v561 = vlaneseq
  %v562 = vshrl.u32 %v561, 7
  %v563 = vsub.s32 0, %v562
  %v564 = vrot.slane %v559, %v563
  %v565 = vadd.f32 %v509, %v564
  %v566 = vadd.f32 %v512, %v564
  %v567 = vadd.f32 %v515, %v564
  %v568 = vadd.f32 %v518, %v564
  %v569 = vadd.f32 %v521, %v564
  %v570 = vadd.f32 %v524, %v564
  %v571 = vadd.f32 %v527, %v564
  %v572 = vadd.f32 %v530, %v564
  %v573 = vadd.f32 %v533, %v564
  %v574 = vadd.f32 %v536, %v564
  %v575 = vadd.f32 %v539, %v564
  %v576 = vadd.f32 %v542, %v564
  %v577 = vadd.f32 %v545, %v564
  %v578 = vadd.f32 %v548, %v564
  %v579 = vadd.f32 %v551, %v564
  %v580 = vadd.f32 %v554, %v564
  %v597 = vlaneseq
  %v598 = vand.u32 %v597, 127
  %v599 = vlaneseq
  %v600 = vshrl.u32 %v599, 7
  %v601 = vsub.s32 %v598, %v600
  %v602 = vrot.slane %v565, %v601
  %v603 = vadd.s32 %v598, 4294967288
  %v604 = vlaneseq
  %v605 = vshrl.u32 %v604, 7
  %v606 = vsub.s32 %v603, %v605
  %v607 = vrot.slane %v566, %v606
  %vm608 = vcmask 130112
  %v609 = vsel %vm608, %v607, %v602
  %v610 = vadd.s32 %v598, 4294967280
  %v611 = vlaneseq
  %v612 = vshrl.u32 %v611, 7
  %v613 = vsub.s32 %v610, %v612
  %v614 = vrot.slane %v567, %v613
  %vm615 = vcmask 195712
  %v616 = vsel %vm615, %v614, %v609
  %v617 = vadd.s32 %v598, 4294967272
  %v618 = vlaneseq
  %v619 = vshrl.u32 %v618, 7
  %v620 = vsub.s32 %v617, %v619
  %v621 = vrot.slane %v568, %v620
  %vm622 = vcmask 261312
  %v623 = vsel %vm622, %v621, %v616
  %v624 = vadd.s32 %v598, 4294967264
  %v625 = vlaneseq
  %v626 = vshrl.u32 %v625, 7
  %v627 = vsub.s32 %v624, %v626
  %v628 = vrot.slane %v569, %v627
  %vm629 = vcmask 326912
  %v630 = vsel %vm629, %v628, %v623
  %v631 = vadd.s32 %v598, 4294967256
  %v632 = vlaneseq
  %v633 = vshrl.u32 %v632, 7
  %v634 = vsub.s32 %v631, %v633
  %v635 = vrot.slane %v570, %v634
  %vm636 = vcmask 392512
  %v637 = vsel %vm636, %v635, %v630
  %v638 = vadd.s32 %v598, 4294967248
  %v639 = vlaneseq
  %v640 = vshrl.u32 %v639, 7
  %v641 = vsub.s32 %v638, %v640
  %v642 = vrot.slane %v571, %v641
  %vm643 = vcmask 458112
  %v644 = vsel %vm643, %v642, %v637
  %v645 = vadd.s32 %v598, 4294967240
  %v646 = vlaneseq
  %v647 = vshrl.u32 %v646, 7
  %v648 = vsub.s32 %v645, %v647
  %v649 = vrot.slane %v572, %v648
  %vm650 = vcmask 523712
  %v651 = vsel %vm650, %v649, %v644
  %v652 = vadd.s32 %v598, 4294967232
  %v653 = vlaneseq
  %v654 = vshrl.u32 %v653, 7
  %v655 = vsub.s32 %v652, %v654
  %v656 = vrot.slane %v573, %v655
  %vm657 = vcmask 589312
  %v658 = vsel %vm657, %v656, %v651
  %v659 = vadd.s32 %v598, 4294967224
  %v660 = vlaneseq
  %v661 = vshrl.u32 %v660, 7
  %v662 = vsub.s32 %v659, %v661
  %v663 = vrot.slane %v574, %v662
  %vm664 = vcmask 654912
  %v665 = vsel %vm664, %v663, %v658
  %v666 = vadd.s32 %v598, 4294967216
  %v667 = vlaneseq
  %v668 = vshrl.u32 %v667, 7
  %v669 = vsub.s32 %v666, %v668
  %v670 = vrot.slane %v575, %v669
  %vm671 = vcmask 720512
  %v672 = vsel %vm671, %v670, %v665
  %v673 = vadd.s32 %v598, 4294967208
  %v674 = vlaneseq
  %v675 = vshrl.u32 %v674, 7
  %v676 = vsub.s32 %v673, %v675
  %v677 = vrot.slane %v576, %v676
  %vm678 = vcmask 786112
  %v679 = vsel %vm678, %v677, %v672
  %v680 = vadd.s32 %v598, 4294967200
  %v681 = vlaneseq
  %v682 = vshrl.u32 %v681, 7
  %v683 = vsub.s32 %v680, %v682
  %v684 = vrot.slane %v577, %v683
  %vm685 = vcmask 851712
  %v686 = vsel %vm685, %v684, %v679
  %v687 = vadd.s32 %v598, 4294967192
  %v688 = vlaneseq
  %v689 = vshrl.u32 %v688, 7
  %v690 = vsub.s32 %v687, %v689
  %v691 = vrot.slane %v578, %v690
  %vm692 = vcmask 917312
  %v693 = vsel %vm692, %v691, %v686
  %v694 = vadd.s32 %v598, 4294967184
  %v695 = vlaneseq
  %v696 = vshrl.u32 %v695, 7
  %v697 = vsub.s32 %v694, %v696
  %v698 = vrot.slane %v579, %v697
  %vm699 = vcmask 982912
  %v700 = vsel %vm699, %v698, %v693
  %v701 = vadd.s32 %v598, 4294967176
  %v702 = vlaneseq
  %v703 = vshrl.u32 %v702, 7
  %v704 = vsub.s32 %v701, %v703
  %v705 = vrot.slane %v580, %v704
  %vm706 = vcmask 1048512
  %v707 = vsel %vm706, %v705, %v700
  %709 = vst [vmem:[%s7] sm:$0x1] %v707
  // Predicated region
  $region30: #{mlp_forward.1} parent=0 // pred_check
    _
  $region31: #{mlp_forward.1} parent=0 // pred_check_branch
    %711 = sbr.rel (0) target = $region33
  $region32: #{mlp_forward.1} parent=0 // pred_region
    _
  $region33: #{mlp_forward.1} parent=0 // pred_fallthru
    _
  // Predicated region
  $region34: #{mlp_forward.1} parent=0 // pred_check
    _
  $region35: #{mlp_forward.1} parent=0 // pred_check_branch
    %713 = sbr.rel (0) target = $region37
  $region36: #{mlp_forward.1} parent=0 // pred_region
    _
  $region37: #{mlp_forward.1} parent=0 // pred_fallthru
    _

</llo_original>
